<compile_context>
chip_gen: v5e
topology: v5e:2x2
jax: 0.10.0
libtpu: 0.0.40
codegen_flags: <defaults>
</compile_context>

<pallas_src>
import jax
import jax.numpy as jnp
from jax.experimental import pallas as pl
from jax.experimental.pallas import tpu as pltpu


def strong_convex_kernel(a_ref, b_ref, th_ref, w_ref, out_ref):
    # a_ref : (n, d*d)  flattened A_i rows (row-major: [i, r*d + c] = A[i, r, c])
    # b_ref : (n, d)
    # th_ref: (1, d)    theta as a row vector
    # w_ref : (1, d*d)  vec(theta (x) theta): w[0, r*d + c] = theta[r] * theta[c]
    # out_ref: (1, 1)   scalar result, SMEM
    A = a_ref[...].astype(jnp.float32)
    bv = b_ref[...].astype(jnp.float32)
    th = th_ref[...].astype(jnp.float32)
    w = w_ref[...].astype(jnp.float32)

    n = A.shape[0]

    # Hoist the sum over n (objective is linear in A_i and b_i):
    #   sum_i theta^T A_i theta = <sum_i A_i, theta (x) theta>
    #   sum_i b_i^T theta       = (sum_i b_i)^T theta
    a_sum = jnp.sum(A, axis=0, keepdims=True)    # (1, d*d)  sublane reduce (XLU)
    b_sum = jnp.sum(bv, axis=0, keepdims=True)   # (1, d)

    quad = 0.5 * jnp.sum(a_sum * w)              # sum_i 0.5 * theta^T A_i theta
    lin = jnp.sum(b_sum * th)                    # sum_i b_i^T theta

    out_ref[0, 0] = (quad + lin) * (1.0 / n)


def strong_convex(A, b, theta):
    """A: (n, d, d), b: (n, d), theta: (d,) -> scalar f32."""
    n, d, _ = A.shape

    # Lane-dense view of A; row-major contiguous, so this reshape is free.
    A_flat = A.reshape(n, d * d)
    th_row = theta.reshape(1, d)
    # vec(theta (x) theta), matching the row-major flattening of A.
    w = (theta.reshape(d, 1) * theta.reshape(1, d)).reshape(1, d * d)

    out = pl.pallas_call(
        strong_convex_kernel,
        out_shape=jax.ShapeDtypeStruct((1, 1), jnp.float32),
        in_specs=[
            pl.BlockSpec(memory_space=pltpu.VMEM),   # A_flat   (n, d*d)
            pl.BlockSpec(memory_space=pltpu.VMEM),   # b        (n, d)
            pl.BlockSpec(memory_space=pltpu.VMEM),   # theta    (1, d)
            pl.BlockSpec(memory_space=pltpu.VMEM),   # w        (1, d*d)
        ],
        out_specs=pl.BlockSpec(memory_space=pltpu.SMEM),
    )(A_flat, b, th_row, w)
    return out[0, 0]


if __name__ == "__main__":
    d = 32   # num_dimensions
    n = 8    # num_terms

    key = jax.random.PRNGKey(0)
    kA, kb = jax.random.split(key)
    A = jax.random.normal(kA, (n, d, d), dtype=jnp.float32)
    b = jax.random.normal(kb, (n, d), dtype=jnp.float32)

    # nn.init.constant_(theta, 1)
    theta = jnp.ones((d,), dtype=jnp.float32)

    out = strong_convex(A, b, theta)
    out = jax.block_until_ready(out)

    # Pure-JAX reference of the PyTorch forward.
    ref = jnp.sum(0.5 * jnp.einsum("d,idk,k->i", theta, A, theta) + b @ theta) / n

    assert jnp.allclose(out, ref, rtol=1e-5, atol=1e-5), (out, ref)
    print("KERNEL_OK")
</pallas_src>

<mosaic_0001>
module attributes {stable_mosaic.version = 11 : i64} {
  func.func @strong_convex_kernel(%arg0: memref<8x1024xf32, #tpu.memory_space<vmem>>, %arg1: memref<8x32xf32, #tpu.memory_space<vmem>>, %arg2: memref<1x32xf32, #tpu.memory_space<vmem>>, %arg3: memref<1x1024xf32, #tpu.memory_space<vmem>>, %arg4: memref<1x1xf32, #tpu.memory_space<smem>>) attributes {dimension_semantics = [], scalar_prefetch = 0 : i64, scratch_operands = 0 : i64, tpu.core_type = #tpu.core_type<tc>} {
    %c0 = arith.constant 0 : index
    %c0_0 = arith.constant 0 : index
    %0 = vector.load %arg0[%c0, %c0_0] : memref<8x1024xf32, #tpu.memory_space<vmem>>, vector<8x1024xf32>
    %c0_1 = arith.constant 0 : index
    %c0_2 = arith.constant 0 : index
    %1 = vector.load %arg1[%c0_1, %c0_2] : memref<8x32xf32, #tpu.memory_space<vmem>>, vector<8x32xf32>
    %c0_3 = arith.constant 0 : index
    %c0_4 = arith.constant 0 : index
    %2 = vector.load %arg2[%c0_3, %c0_4] : memref<1x32xf32, #tpu.memory_space<vmem>>, vector<1x32xf32>
    %c0_5 = arith.constant 0 : index
    %c0_6 = arith.constant 0 : index
    %3 = vector.load %arg3[%c0_5, %c0_6] : memref<1x1024xf32, #tpu.memory_space<vmem>>, vector<1x1024xf32>
    %cst = arith.constant dense<0.000000e+00> : vector<1024xf32>
    %4 = vector.multi_reduction <add>, %0, %cst [0] : vector<8x1024xf32> to vector<1024xf32>
    %5 = vector.shape_cast %4 : vector<1024xf32> to vector<1x1024xf32>
    %cst_7 = arith.constant dense<0.000000e+00> : vector<32xf32>
    %6 = vector.multi_reduction <add>, %1, %cst_7 [0] : vector<8x32xf32> to vector<32xf32>
    %7 = vector.shape_cast %6 : vector<32xf32> to vector<1x32xf32>
    %8 = arith.mulf %5, %3 : vector<1x1024xf32>
    %9 = vector.shape_cast %8 : vector<1x1024xf32> to vector<1x1x1024xf32>
    %cst_8 = arith.constant dense<0.000000e+00> : vector<1xf32>
    %10 = vector.multi_reduction <add>, %9, %cst_8 [1, 2] : vector<1x1x1024xf32> to vector<1xf32>
    %11 = vector.shape_cast %10 : vector<1xf32> to vector<1x1x1xf32>
    %12 = vector.extract %11[0, 0, 0] : f32 from vector<1x1x1xf32>
    %cst_9 = arith.constant 5.000000e-01 : f32
    %13 = arith.mulf %cst_9, %12 : f32
    %14 = arith.mulf %7, %2 : vector<1x32xf32>
    %15 = vector.shape_cast %14 : vector<1x32xf32> to vector<1x1x32xf32>
    %cst_10 = arith.constant dense<0.000000e+00> : vector<1xf32>
    %16 = vector.multi_reduction <add>, %15, %cst_10 [1, 2] : vector<1x1x32xf32> to vector<1xf32>
    %17 = vector.shape_cast %16 : vector<1xf32> to vector<1x1x1xf32>
    %18 = vector.extract %17[0, 0, 0] : f32 from vector<1x1x1xf32>
    %19 = arith.addf %13, %18 : f32
    %cst_11 = arith.constant 1.250000e-01 : f32
    %20 = arith.mulf %19, %cst_11 : f32
    %c0_12 = arith.constant 0 : index
    %c0_13 = arith.constant 0 : index
    %21 = memref.load %arg4[%c0_12, %c0_13] : memref<1x1xf32, #tpu.memory_space<smem>>
    memref.store %20, %arg4[%c0_12, %c0_13] : memref<1x1xf32, #tpu.memory_space<smem>>
    return
  }
}

</mosaic_0001>

<llo_original>
// kernel: tpu_custom_call.1
$region0: #{tpu_custom_call.1}
  #allocation0 [shape = 'u32[]', space=smem, size = 0x4, offset = 0x4, fixed_abs, tag = 'smem constant byte address 0x4 - core index']
  #allocation1 [shape = 'u32[72,128]{1,0:T(1,128)}', space=vmem, size = 0x9000, scoped, tag = 'internal scratch']
  %s0 = inlined_call_operand.hbm [shape: f32[8,1024], index: 0, kind: input, shape index: {}]
  %s1 = inlined_call_operand.hbm [shape: f32[8,32], index: 1, kind: input, shape index: {}]
  %s2 = inlined_call_operand.vmem [shape: f32[1,32], index: 2, kind: input, shape index: {}]
  %s3 = inlined_call_operand.hbm [shape: f32[1,1024], index: 3, kind: input, shape index: {}]
  %s4 = inlined_call_operand.hbm [shape: f32[1,1], index: 4, kind: output, shape index: {}]
  %s5 = sld [smem:[#allocation0]]
  $region38: #{tpu_custom_call.1} parent=0
    _
  %s7 = ssub.s32 1, %s5
  %s8 = scalar_select 0, %s7, %s5
  $region1: #{tpu_custom_call.1} parent=0
    #allocation2 [shape = 'u8[32768]{0}', space=vmem, size = 0x8000, scoped, tag = 'input window, operand 0, single buffered']
    #allocation3 [shape = 's32[1]{0}', space=sflag, size = 0x4, scoped, tag = 'scoped memory for tpu_custom_call.1']
    #allocation4 [shape = 's32[1]{0}', space=sflag, size = 0x4, scoped, tag = 'scoped memory for tpu_custom_call.1']
    #allocation5 [shape = 'u8[4096]{0}', space=vmem, size = 0x1000, scoped, tag = 'input window, operand 1, single buffered']
    #allocation6 [shape = 's32[1]{0}', space=sflag, size = 0x4, scoped, tag = 'scoped memory for tpu_custom_call.1']
    #allocation7 [shape = 'u8[4096]{0}', space=vmem, size = 0x1000, scoped, tag = 'input window, operand 3, single buffered']
    #allocation8 [shape = 'u8[512]{0}', space=smem, size = 0x200, scoped, tag = 'output window, operand 0, single buffered']
    %9 = vsyncpa [#allocation3], 0
    %10 = vsyncpa [#allocation6], 0
    %11 = vsyncpa [#allocation4], 0
    // Predicated region
    $region2: #{tpu_custom_call.1} parent=1 // pred_check
      _
    $region3: #{tpu_custom_call.1} parent=1 // pred_check_branch
      %13 = sbr.rel (0) target = $region5
    $region4: #{tpu_custom_call.1} parent=1 // pred_region
      %15 = vsyncadd [#allocation3], 0
      %s17 = sshll.u32 %s0, 4
      %s18 = int_to_ptr.hbm [resolvable:$true] %s17
      %s19 = sshll.u32 [#allocation2], 4
      %s20 = int_to_ptr.vmem [resolvable:$true] %s19
      %22 = dma.hbm_to_vmem [thread:$0]  %s18, 1024, %s20, [#allocation3]
    $region5: #{tpu_custom_call.1} parent=1 // pred_fallthru
      _
    // Predicated region
    $region6: #{tpu_custom_call.1} parent=1 // pred_check
      _
    $region7: #{tpu_custom_call.1} parent=1 // pred_check_branch
      %24 = sbr.rel (0) target = $region9
    $region8: #{tpu_custom_call.1} parent=1 // pred_region
      %26 = vsyncadd [#allocation6], 0
      %s28 = sshll.u32 %s1, 4
      %s29 = int_to_ptr.hbm [resolvable:$true] %s28
      %s30 = sshll.u32 [#allocation5], 4
      %s31 = int_to_ptr.vmem [resolvable:$true] %s30
      %33 = dma.hbm_to_vmem [thread:$0]  %s29, 128, %s31, [#allocation6]
    $region9: #{tpu_custom_call.1} parent=1 // pred_fallthru
      _
    // Predicated region
    $region10: #{tpu_custom_call.1} parent=1 // pred_check
      _
    $region11: #{tpu_custom_call.1} parent=1 // pred_check_branch
      %35 = sbr.rel (0) target = $region13
    $region12: #{tpu_custom_call.1} parent=1 // pred_region
      _
    $region13: #{tpu_custom_call.1} parent=1 // pred_fallthru
      _
    // Predicated region
    $region14: #{tpu_custom_call.1} parent=1 // pred_check
      _
    $region15: #{tpu_custom_call.1} parent=1 // pred_check_branch
      %37 = sbr.rel (0) target = $region17
    $region16: #{tpu_custom_call.1} parent=1 // pred_region
      %39 = vsyncadd [#allocation6], 0
      %s41 = sshll.u32 %s3, 4
      %s42 = int_to_ptr.hbm [resolvable:$true] %s41
      %s43 = sshll.u32 [#allocation7], 4
      %s44 = int_to_ptr.vmem [resolvable:$true] %s43
      %46 = dma.hbm_to_vmem [thread:$0]  %s42, 128, %s44, [#allocation6]
    $region17: #{tpu_custom_call.1} parent=1 // pred_fallthru
      _
    // Predicated region
    $region18: #{tpu_custom_call.1} parent=1 // pred_check
      _
    $region19: #{tpu_custom_call.1} parent=1 // pred_check_branch
      %48 = sbr.rel (0) target = $region21
    $region20: #{tpu_custom_call.1} parent=1 // pred_region
      %50 = dma.done [#allocation3], 1024
    $region21: #{tpu_custom_call.1} parent=1 // pred_fallthru
      _
    // Predicated region
    $region22: #{tpu_custom_call.1} parent=1 // pred_check
      _
    $region23: #{tpu_custom_call.1} parent=1 // pred_check_branch
      %52 = sbr.rel (0) target = $region25
    $region24: #{tpu_custom_call.1} parent=1 // pred_region
      %54 = dma.done [#allocation6], 128
    $region25: #{tpu_custom_call.1} parent=1 // pred_fallthru
      _
    // Predicated region
    $region26: #{tpu_custom_call.1} parent=1 // pred_check
      _
    $region27: #{tpu_custom_call.1} parent=1 // pred_check_branch
      %56 = sbr.rel (0) target = $region29
    $region28: #{tpu_custom_call.1} parent=1 // pred_region
      %58 = dma.done [#allocation6], 128
    $region29: #{tpu_custom_call.1} parent=1 // pred_fallthru
      _
    %v59 = vld [vmem:[#allocation2] sm:$0xff]
    %v60 = vld [vmem:[#allocation2 + $0x8] sm:$0xff]
    %v61 = vld [vmem:[#allocation2 + $0x10] sm:$0xff]
    %v62 = vld [vmem:[#allocation2 + $0x18] sm:$0xff]
    %v63 = vld [vmem:[#allocation2 + $0x20] sm:$0xff]
    %v64 = vld [vmem:[#allocation2 + $0x28] sm:$0xff]
    %v65 = vld [vmem:[#allocation2 + $0x30] sm:$0xff]
    %v66 = vld [vmem:[#allocation2 + $0x38] sm:$0xff]
    %v67 = vld [vmem:[#allocation5] sm:$0xff]
    %v68 = vld [vmem:[%s2] sm:$0x1]
    %v69 = vld [vmem:[#allocation7] sm:$0xff]
    %v70 = vrot.slane %v59, 4
    %v71 = vadd.f32 %v59, %v70
    %v72 = vrot.slane %v71, 2
    %v73 = vadd.f32 %v71, %v72
    %v74 = vrot.slane %v73, 1
    %v75 = vadd.f32 %v73, %v74
    %v76 = vrot.slane %v60, 4
    %v77 = vadd.f32 %v60, %v76
    %v78 = vrot.slane %v77, 2
    %v79 = vadd.f32 %v77, %v78
    %v80 = vrot.slane %v79, 1
    %v81 = vadd.f32 %v79, %v80
    %v82 = vrot.slane %v61, 4
    %v83 = vadd.f32 %v61, %v82
    %v84 = vrot.slane %v83, 2
    %v85 = vadd.f32 %v83, %v84
    %v86 = vrot.slane %v85, 1
    %v87 = vadd.f32 %v85, %v86
    %v88 = vrot.slane %v62, 4
    %v89 = vadd.f32 %v62, %v88
    %v90 = vrot.slane %v89, 2
    %v91 = vadd.f32 %v89, %v90
    %v92 = vrot.slane %v91, 1
    %v93 = vadd.f32 %v91, %v92
    %v94 = vrot.slane %v63, 4
    %v95 = vadd.f32 %v63, %v94
    %v96 = vrot.slane %v95, 2
    %v97 = vadd.f32 %v95, %v96
    %v98 = vrot.slane %v97, 1
    %v99 = vadd.f32 %v97, %v98
    %v100 = vrot.slane %v64, 4
    %v101 = vadd.f32 %v64, %v100
    %v102 = vrot.slane %v101, 2
    %v103 = vadd.f32 %v101, %v102
    %v104 = vrot.slane %v103, 1
    %v105 = vadd.f32 %v103, %v104
    %v106 = vrot.slane %v65, 4
    %v107 = vadd.f32 %v65, %v106
    %v108 = vrot.slane %v107, 2
    %v109 = vadd.f32 %v107, %v108
    %v110 = vrot.slane %v109, 1
    %v111 = vadd.f32 %v109, %v110
    %v112 = vrot.slane %v66, 4
    %v113 = vadd.f32 %v66, %v112
    %v114 = vrot.slane %v113, 2
    %v115 = vadd.f32 %v113, %v114
    %v116 = vrot.slane %v115, 1
    %v117 = vadd.f32 %v115, %v116
    %vm118 = vcmask 261120
    %v119 = vsel %vm118, %v67, 0.0
    %v120 = vrot.slane %v119, 4
    %v121 = vadd.f32 %v119, %v120
    %v122 = vrot.slane %v121, 2
    %v123 = vadd.f32 %v121, %v122
    %v124 = vrot.slane %v123, 1
    %v125 = vadd.f32 %v123, %v124
    %v127 = vperm.slane %v69, 0
    %v128 = vperm.slane %v69, 1
    %v129 = vperm.slane %v69, 2
    %v130 = vperm.slane %v69, 3
    %v131 = vperm.slane %v69, 4
    %v132 = vperm.slane %v69, 5
    %v133 = vperm.slane %v69, 6
    %v134 = vperm.slane %v69, 7
    %v143 = vmul.f32 %v75, %v127
    %v144 = vmul.f32 %v81, %v128
    %v145 = vmul.f32 %v87, %v129
    %v146 = vmul.f32 %v93, %v130
    %v147 = vmul.f32 %v99, %v131
    %v148 = vmul.f32 %v105, %v132
    %v149 = vmul.f32 %v111, %v133
    %v150 = vmul.f32 %v117, %v134
    %vm151 = vcmask 1040384
    %v152 = vsel %vm151, %v143, 0.0
    %v153 = vsel %vm151, %v144, 0.0
    %v154 = vadd.f32 %v152, %v153
    %v155 = vsel %vm151, %v145, 0.0
    %v156 = vadd.f32 %v154, %v155
    %v157 = vsel %vm151, %v146, 0.0
    %v158 = vadd.f32 %v156, %v157
    %v159 = vsel %vm151, %v147, 0.0
    %v160 = vadd.f32 %v158, %v159
    %v161 = vsel %vm151, %v148, 0.0
    %v162 = vadd.f32 %v160, %v161
    %v163 = vsel %vm151, %v149, 0.0
    %v164 = vadd.f32 %v162, %v163
    %v165 = vsel %vm151, %v150, 0.0
    %v166 = vadd.f32 %v164, %v165
    %167 = vadd.xlane.f32.xlu0 %v166
    %v168 = vpop.xlane.xlu0 %167
    %v169 = vrot.slane %v168, 4
    %v170 = vadd.f32 %v168, %v169
    %v171 = vrot.slane %v170, 2
    %v172 = vadd.f32 %v170, %v171
    %v173 = vrot.slane %v172, 1
    %v174 = vadd.f32 %v172, %v173
    %s175 = vtos %v174
    %s176 = smul.f32 %s175, 0.5
    %v177 = vmul.f32 %v125, %v68
    %vm178 = vcmask 253952
    %v179 = vsel %vm178, %v177, 0.0
    %180 = vadd.xlane.f32.xlu0 %v179
    %v181 = vpop.xlane.xlu0 %180
    %v182 = vrot.slane %v181, 4
    %v183 = vadd.f32 %v181, %v182
    %v184 = vrot.slane %v183, 2
    %v185 = vadd.f32 %v183, %v184
    %v186 = vrot.slane %v185, 1
    %v187 = vadd.f32 %v185, %v186
    %s188 = vtos %v187
    %s189 = sadd.f32 %s176, %s188
    %s190 = smul.f32 %s189, 0.125
    %s191 = scalar_lea.smem [#allocation8], 0
    %192 = sst [smem:[%s191]] %s190
    // Predicated region
    $region30: #{tpu_custom_call.1} parent=1 // pred_check
      _
    $region31: #{tpu_custom_call.1} parent=1 // pred_check_branch
      %194 = sbr.rel (0) target = $region33
    $region32: #{tpu_custom_call.1} parent=1 // pred_region
      %196 = vsyncadd [#allocation4], 0
      %s198 = sshll.u32 %s4, 4
      %s199 = int_to_ptr.hbm [resolvable:$true] %s198
      %201 = dma.smem_to_hbm [#allocation8], 16, %s199, [#allocation4]
    $region33: #{tpu_custom_call.1} parent=1 // pred_fallthru
      _
    // Predicated region
    $region34: #{tpu_custom_call.1} parent=1 // pred_check
      _
    $region35: #{tpu_custom_call.1} parent=1 // pred_check_branch
      %203 = sbr.rel (0) target = $region37
    $region36: #{tpu_custom_call.1} parent=1 // pred_region
      %205 = dma.done [#allocation4], 16
    $region37: #{tpu_custom_call.1} parent=1 // pred_fallthru
      _
    %206 = sfence
    %207 = vsyncpa [#allocation3], 1
    %208 = vsyncpa [#allocation6], 1
    %209 = vsyncpa [#allocation4], 1

</llo_original>
